<compile_context>
chip_gen: v7x
topology: tpu7x:2x2x1
jax: 0.10.0
libtpu: 0.0.40
codegen_flags: <defaults>
</compile_context>

<pallas_src>
import functools
from collections import namedtuple

import jax
import jax.numpy as jnp
from jax.experimental import pallas as pl
from jax.experimental.pallas import tpu as pltpu


VAEConfig = namedtuple("VAEConfig", ["encoder_dim", "z_dim", "decoder_dim", "dp"])


def _round_up(x, m):
    return ((x + m - 1) // m) * m


# ----------------------------------------------------------------------------
# Fused Pallas kernel: entire VAE forward (encoder -> heads -> reparam -> decoder)
# ----------------------------------------------------------------------------

def _vae_fused_kernel(x_ref, w_ref, b_ref, eps_ref, out_ref, *, cfg):
    """Whole VAE forward for one batch tile.

    x_ref   : [tm, Din0]            raw input tile
    w_ref   : [L, DP, DP]           zero-padded, pre-transposed [Din, Dout] weights
                                    (encoder layers, fused fc1|fc2 head, decoder layers)
    b_ref   : [L, 1, DP]            zero-padded biases
    eps_ref : [tm, z]               reparameterization noise
    out_ref : [tm, 2*z + out_dim]   [ mean | log_var | x_recon ]  (single lane-dense slab)
    """
    n_enc = len(cfg.encoder_dim) - 1
    n_dec = len(cfg.decoder_dim) - 1
    z = cfg.z_dim
    dp = cfg.dp
    out_dim = cfg.decoder_dim[-1]

    h = x_ref[...]
    cur = cfg.encoder_dim[0]          # true contraction width of the next matmul
    li = 0

    # ---- Encoder: Linear + ReLU --------------------------------------------
    for _ in range(n_enc):
        w = w_ref[li]
        if cur < dp:
            w = w[:cur, :]
        h = jnp.dot(h, w, preferred_element_type=jnp.float32) + b_ref[li]
        h = jnp.maximum(h, 0.0)       # padded lanes stay exactly 0
        cur = dp
        li += 1

    # ---- Latent heads (fc1|fc2 fused into one matmul) ----------------------
    w = w_ref[li]
    if cur < dp:
        w = w[:cur, :]
    y = jnp.dot(h, w, preferred_element_type=jnp.float32) + b_ref[li]
    li += 1
    mean = y[:, :z]
    log_var = y[:, z:2 * z]

    # ---- Reparameterization trick ------------------------------------------
    d = mean + jnp.exp(log_var * 0.5) * eps_ref[...]
    cur = z

    # ---- Decoder: ReLU on hidden layers, Sigmoid on the output layer -------
    for i in range(n_dec):
        w = w_ref[li]
        if cur < dp:
            w = w[:cur, :]
        d = jnp.dot(d, w, preferred_element_type=jnp.float32) + b_ref[li]
        cur = dp
        li += 1
        if i < n_dec - 1:
            d = jnp.maximum(d, 0.0)
        else:
            d = 0.5 * (jnp.tanh(0.5 * d) + 1.0)   # sigmoid via EUP tanh

    # ---- Single lane-dense output slab: [mean | log_var | recon] -----------
    out_ref[...] = jnp.concatenate(
        [y[:, :2 * z], d[:, :out_dim]], axis=1).astype(out_ref.dtype)


# ----------------------------------------------------------------------------
# Wrapper: single pallas_call, batch grid, packed-slab inputs, one output slab
# ----------------------------------------------------------------------------

def vae_forward(params, x, eps, *, cfg):
    """Returns (mean, log_var, x_recon), mirroring VAE.forward."""
    B, din0 = x.shape
    z = cfg.z_dim
    dp = cfg.dp
    out_dim = cfg.decoder_dim[-1]
    out_w = 2 * z + out_dim
    w_slab = params["w_slab"]
    b_slab = params["b_slab"]
    L = w_slab.shape[0]

    # Batch tiling: block (tm, D), tm up to 256, batch padded to a multiple of tm.
    tm = min(256, _round_up(B, 8))
    b_pad = _round_up(B, tm)
    if b_pad != B:
        x = jnp.pad(x, ((0, b_pad - B), (0, 0)))
        eps = jnp.pad(eps, ((0, b_pad - B), (0, 0)))

    kernel = functools.partial(_vae_fused_kernel, cfg=cfg)

    out = pl.pallas_call(
        kernel,
        out_shape=jax.ShapeDtypeStruct((b_pad, out_w), jnp.float32),
        grid_spec=pltpu.PrefetchScalarGridSpec(
            num_scalar_prefetch=0,
            grid=(b_pad // tm,),
            in_specs=[
                pl.BlockSpec((tm, din0), lambda i: (i, 0)),     # x tile
                pl.BlockSpec((L, dp, dp), lambda i: (0, 0, 0)), # weights: VMEM-resident
                pl.BlockSpec((L, 1, dp), lambda i: (0, 0, 0)),  # biases:  VMEM-resident
                pl.BlockSpec((tm, z), lambda i: (i, 0)),        # eps tile
            ],
            out_specs=pl.BlockSpec((tm, out_w), lambda i: (i, 0)),
        ),
        compiler_params=pltpu.CompilerParams(
            dimension_semantics=("parallel",)),
    )(x, w_slab, b_slab, eps)

    out = out[:B]
    mean = out[:, :z]
    log_var = out[:, z:2 * z]
    x_recon = out[:, 2 * z:]
    return mean, log_var, x_recon


# ----------------------------------------------------------------------------
# Parameter init: packed zero-padded slabs + per-layer copies for the reference
# ----------------------------------------------------------------------------

def init_vae_params(key, cfg):
    """Builds the packed [L, DP, DP] weight slab / [L, 1, DP] bias slab.

    Layer order: encoder layers, fused (fc1 | fc2) head, decoder layers.
    Weights are stored pre-transposed [Din, Dout].
    """
    enc, z, dec, dp = cfg.encoder_dim, cfg.z_dim, cfg.decoder_dim, cfg.dp

    layer_dims = []
    for i in range(1, len(enc)):
        layer_dims.append((enc[i - 1], enc[i]))
    layer_dims.append((enc[-1], 2 * z))            # fused fc1 | fc2 head
    for i in range(1, len(dec)):
        layer_dims.append((dec[i - 1], dec[i]))
    L = len(layer_dims)

    w_slab = jnp.zeros((L, dp, dp), jnp.float32)
    b_slab = jnp.zeros((L, 1, dp), jnp.float32)
    ref_layers = []

    keys = jax.random.split(key, L)
    for l, (din, dout) in enumerate(layer_dims):
        kw, kb = jax.random.split(keys[l])
        bound = 1.0 / (din ** 0.5)
        w = jax.random.uniform(kw, (din, dout), jnp.float32, -bound, bound)
        b = jax.random.uniform(kb, (1, dout), jnp.float32, -bound, bound)
        w_slab = w_slab.at[l, :din, :dout].set(w)
        b_slab = b_slab.at[l, :, :dout].set(b)
        ref_layers.append((w, b))

    return {"w_slab": w_slab, "b_slab": b_slab}, ref_layers


# ----------------------------------------------------------------------------
# Pure-JAX reference (for correctness check)
# ----------------------------------------------------------------------------

def vae_forward_ref(ref_layers, x, eps, *, cfg):
    n_enc = len(cfg.encoder_dim) - 1
    n_dec = len(cfg.decoder_dim) - 1
    z_dim = cfg.z_dim

    h = x
    idx = 0
    for _ in range(n_enc):
        w, b = ref_layers[idx]; idx += 1
        h = jnp.maximum(h @ w + b, 0.0)
    w, b = ref_layers[idx]; idx += 1
    y = h @ w + b
    mean, log_var = y[:, :z_dim], y[:, z_dim:]
    d = mean + jnp.exp(log_var * 0.5) * eps
    for i in range(n_dec):
        w, b = ref_layers[idx]; idx += 1
        d = d @ w + b
        d = jnp.maximum(d, 0.0) if i < n_dec - 1 else jax.nn.sigmoid(d)
    return mean, log_var, d


# ----------------------------------------------------------------------------
# Main
# ----------------------------------------------------------------------------

if __name__ == "__main__":
    # Small config consistent with the module:
    #   encoder_dim=[64, 32], z_dim=16, decoder_dim=[16, 32, 64]
    #   encoder_activation = ReLU, decoder_activation = ReLU,
    #   output_activation = Sigmoid
    encoder_dim = [64, 32]
    z_dim = 16
    decoder_dim = [z_dim, 32, 64]
    batch = 8

    dp = _round_up(max(encoder_dim + [2 * z_dim] + decoder_dim), 128)
    cfg = VAEConfig(tuple(encoder_dim), z_dim, tuple(decoder_dim), dp)

    root = jax.random.PRNGKey(0)
    k_param, k_x, k_eps = jax.random.split(root, 3)

    params, ref_layers = init_vae_params(k_param, cfg)
    x = jax.random.normal(k_x, (batch, encoder_dim[0]), jnp.float32)
    # epsilon for the reparameterization trick (torch.randn_like equivalent)
    eps = jax.random.normal(k_eps, (batch, z_dim), jnp.float32)

    fwd = jax.jit(functools.partial(vae_forward, cfg=cfg))
    mean, log_var, x_recon = fwd(params, x, eps)
    jax.block_until_ready((mean, log_var, x_recon))

    # Shape / sanity checks
    assert mean.shape == (batch, z_dim)
    assert log_var.shape == (batch, z_dim)
    assert x_recon.shape == (batch, decoder_dim[-1])
    assert bool(jnp.all(jnp.isfinite(mean)))
    assert bool(jnp.all(jnp.isfinite(log_var)))
    assert bool(jnp.all((x_recon >= 0.0) & (x_recon <= 1.0)))  # sigmoid output

    # Numerical check vs. pure-JAX reference
    m_r, lv_r, xr_r = vae_forward_ref(ref_layers, x, eps, cfg=cfg)
    assert bool(jnp.allclose(mean, m_r, atol=2e-5, rtol=2e-5))
    assert bool(jnp.allclose(log_var, lv_r, atol=2e-5, rtol=2e-5))
    assert bool(jnp.allclose(x_recon, xr_r, atol=2e-5, rtol=2e-5))

    print("KERNEL_OK")
</pallas_src>

<mosaic_0001>
module attributes {stable_mosaic.version = 11 : i64} {
  func.func @_vae_fused_kernel(%arg0: i32, %arg1: memref<8x64xf32, #tpu.memory_space<vmem>>, %arg2: memref<4x128x128xf32, #tpu.memory_space<vmem>>, %arg3: memref<4x1x128xf32, #tpu.memory_space<vmem>>, %arg4: memref<8x16xf32, #tpu.memory_space<vmem>>, %arg5: memref<8x96xf32, #tpu.memory_space<vmem>>) attributes {dimension_semantics = [#tpu.dimension_semantics<parallel>], iteration_bounds = array<i64: 1>, scalar_prefetch = 0 : i64, scratch_operands = 0 : i64, tpu.core_type = #tpu.core_type<tc>, window_params = [{transform_indices = @transform_0, window_bounds = array<i64: 8, 64>}, {pipeline_mode = #tpu.pipeline_mode<synchronous>, transform_indices = @transform_1, window_bounds = array<i64: 4, 128, 128>}, {pipeline_mode = #tpu.pipeline_mode<synchronous>, transform_indices = @transform_2, window_bounds = array<i64: 4, 1, 128>}, {transform_indices = @transform_3, window_bounds = array<i64: 8, 16>}, {transform_indices = @transform_4, window_bounds = array<i64: 8, 96>}]} {
    %c0 = arith.constant 0 : index
    %c0_0 = arith.constant 0 : index
    %0 = vector.load %arg1[%c0, %c0_0] : memref<8x64xf32, #tpu.memory_space<vmem>>, vector<8x64xf32>
    %c0_1 = arith.constant 0 : index
    %c0_2 = arith.constant 0 : index
    %c0_3 = arith.constant 0 : index
    %1 = vector.load %arg2[%c0_1, %c0_2, %c0_3] : memref<4x128x128xf32, #tpu.memory_space<vmem>>, vector<1x128x128xf32>
    %2 = vector.shape_cast %1 : vector<1x128x128xf32> to vector<128x128xf32>
    %3 = vector.extract_strided_slice %2 {offsets = [0, 0], sizes = [64, 128], strides = [1, 1]} : vector<128x128xf32> to vector<64x128xf32>
    %cst = arith.constant dense<0.000000e+00> : vector<8x128xf32>
    %4 = tpu.matmul %0, %3, %cst {dimension_numbers = #tpu.dot_dimension_numbers<[1], [0], [0], [1], [0, 0, 1, 1], [], []>} : vector<8x64xf32>, vector<64x128xf32>, vector<8x128xf32> -> vector<8x128xf32>
    %c0_4 = arith.constant 0 : index
    %c0_5 = arith.constant 0 : index
    %c0_6 = arith.constant 0 : index
    %5 = vector.load %arg3[%c0_4, %c0_5, %c0_6] : memref<4x1x128xf32, #tpu.memory_space<vmem>>, vector<1x1x128xf32>
    %6 = vector.shape_cast %5 : vector<1x1x128xf32> to vector<1x128xf32>
    %7 = vector.broadcast %6 : vector<1x128xf32> to vector<8x128xf32>
    %8 = arith.addf %4, %7 : vector<8x128xf32>
    %cst_7 = arith.constant 0.000000e+00 : f32
    %9 = vector.broadcast %cst_7 : f32 to vector<8x128xf32>
    %10 = arith.maximumf %8, %9 : vector<8x128xf32>
    %c1 = arith.constant 1 : index
    %c0_8 = arith.constant 0 : index
    %c0_9 = arith.constant 0 : index
    %11 = vector.load %arg2[%c1, %c0_8, %c0_9] : memref<4x128x128xf32, #tpu.memory_space<vmem>>, vector<1x128x128xf32>
    %12 = vector.shape_cast %11 : vector<1x128x128xf32> to vector<128x128xf32>
    %cst_10 = arith.constant dense<0.000000e+00> : vector<8x128xf32>
    %13 = tpu.matmul %10, %12, %cst_10 {dimension_numbers = #tpu.dot_dimension_numbers<[1], [0], [0], [1], [0, 0, 1, 1], [], []>} : vector<8x128xf32>, vector<128x128xf32>, vector<8x128xf32> -> vector<8x128xf32>
    %c1_11 = arith.constant 1 : index
    %c0_12 = arith.constant 0 : index
    %c0_13 = arith.constant 0 : index
    %14 = vector.load %arg3[%c1_11, %c0_12, %c0_13] : memref<4x1x128xf32, #tpu.memory_space<vmem>>, vector<1x1x128xf32>
    %15 = vector.shape_cast %14 : vector<1x1x128xf32> to vector<1x128xf32>
    %16 = vector.broadcast %15 : vector<1x128xf32> to vector<8x128xf32>
    %17 = arith.addf %13, %16 : vector<8x128xf32>
    %18 = vector.extract_strided_slice %17 {offsets = [0, 0], sizes = [8, 16], strides = [1, 1]} : vector<8x128xf32> to vector<8x16xf32>
    %19 = vector.extract_strided_slice %17 {offsets = [0, 16], sizes = [8, 16], strides = [1, 1]} : vector<8x128xf32> to vector<8x16xf32>
    %cst_14 = arith.constant 5.000000e-01 : f32
    %20 = vector.broadcast %cst_14 : f32 to vector<8x16xf32>
    %21 = arith.mulf %19, %20 : vector<8x16xf32>
    %22 = math.exp %21 : vector<8x16xf32>
    %c0_15 = arith.constant 0 : index
    %c0_16 = arith.constant 0 : index
    %23 = vector.load %arg4[%c0_15, %c0_16] : memref<8x16xf32, #tpu.memory_space<vmem>>, vector<8x16xf32>
    %24 = arith.mulf %22, %23 : vector<8x16xf32>
    %25 = arith.addf %18, %24 : vector<8x16xf32>
    %c2 = arith.constant 2 : index
    %c0_17 = arith.constant 0 : index
    %c0_18 = arith.constant 0 : index
    %26 = vector.load %arg2[%c2, %c0_17, %c0_18] : memref<4x128x128xf32, #tpu.memory_space<vmem>>, vector<1x128x128xf32>
    %27 = vector.shape_cast %26 : vector<1x128x128xf32> to vector<128x128xf32>
    %28 = vector.extract_strided_slice %27 {offsets = [0, 0], sizes = [16, 128], strides = [1, 1]} : vector<128x128xf32> to vector<16x128xf32>
    %cst_19 = arith.constant dense<0.000000e+00> : vector<8x128xf32>
    %29 = tpu.matmul %25, %28, %cst_19 {dimension_numbers = #tpu.dot_dimension_numbers<[1], [0], [0], [1], [0, 0, 1, 1], [], []>} : vector<8x16xf32>, vector<16x128xf32>, vector<8x128xf32> -> vector<8x128xf32>
    %c2_20 = arith.constant 2 : index
    %c0_21 = arith.constant 0 : index
    %c0_22 = arith.constant 0 : index
    %30 = vector.load %arg3[%c2_20, %c0_21, %c0_22] : memref<4x1x128xf32, #tpu.memory_space<vmem>>, vector<1x1x128xf32>
    %31 = vector.shape_cast %30 : vector<1x1x128xf32> to vector<1x128xf32>
    %32 = vector.broadcast %31 : vector<1x128xf32> to vector<8x128xf32>
    %33 = arith.addf %29, %32 : vector<8x128xf32>
    %cst_23 = arith.constant 0.000000e+00 : f32
    %34 = vector.broadcast %cst_23 : f32 to vector<8x128xf32>
    %35 = arith.maximumf %33, %34 : vector<8x128xf32>
    %c3 = arith.constant 3 : index
    %c0_24 = arith.constant 0 : index
    %c0_25 = arith.constant 0 : index
    %36 = vector.load %arg2[%c3, %c0_24, %c0_25] : memref<4x128x128xf32, #tpu.memory_space<vmem>>, vector<1x128x128xf32>
    %37 = vector.shape_cast %36 : vector<1x128x128xf32> to vector<128x128xf32>
    %cst_26 = arith.constant dense<0.000000e+00> : vector<8x128xf32>
    %38 = tpu.matmul %35, %37, %cst_26 {dimension_numbers = #tpu.dot_dimension_numbers<[1], [0], [0], [1], [0, 0, 1, 1], [], []>} : vector<8x128xf32>, vector<128x128xf32>, vector<8x128xf32> -> vector<8x128xf32>
    %c3_27 = arith.constant 3 : index
    %c0_28 = arith.constant 0 : index
    %c0_29 = arith.constant 0 : index
    %39 = vector.load %arg3[%c3_27, %c0_28, %c0_29] : memref<4x1x128xf32, #tpu.memory_space<vmem>>, vector<1x1x128xf32>
    %40 = vector.shape_cast %39 : vector<1x1x128xf32> to vector<1x128xf32>
    %41 = vector.broadcast %40 : vector<1x128xf32> to vector<8x128xf32>
    %42 = arith.addf %38, %41 : vector<8x128xf32>
    %cst_30 = arith.constant 5.000000e-01 : f32
    %43 = vector.broadcast %cst_30 : f32 to vector<8x128xf32>
    %44 = arith.mulf %43, %42 : vector<8x128xf32>
    %45 = math.tanh %44 : vector<8x128xf32>
    %cst_31 = arith.constant 1.000000e+00 : f32
    %46 = vector.broadcast %cst_31 : f32 to vector<8x128xf32>
    %47 = arith.addf %45, %46 : vector<8x128xf32>
    %cst_32 = arith.constant 5.000000e-01 : f32
    %48 = vector.broadcast %cst_32 : f32 to vector<8x128xf32>
    %49 = arith.mulf %48, %47 : vector<8x128xf32>
    %50 = vector.extract_strided_slice %17 {offsets = [0, 0], sizes = [8, 32], strides = [1, 1]} : vector<8x128xf32> to vector<8x32xf32>
    %51 = vector.extract_strided_slice %49 {offsets = [0, 0], sizes = [8, 64], strides = [1, 1]} : vector<8x128xf32> to vector<8x64xf32>
    %52 = tpu.concatenate %50, %51 in 1 : vector<8x32xf32>, vector<8x64xf32> -> vector<8x96xf32>
    %c0_33 = arith.constant 0 : index
    %c0_34 = arith.constant 0 : index
    %53 = vector.load %arg5[%c0_33, %c0_34] : memref<8x96xf32, #tpu.memory_space<vmem>>, vector<8x96xf32>
    tpu.vector_store %arg5[%c0_33, %c0_34], %52 {strides = array<i32>} : memref<8x96xf32, #tpu.memory_space<vmem>>, vector<8x96xf32>,
    return
  }
  func.func @transform_0(%arg0: i32) -> (i32, i32) {
    %c0_i32 = arith.constant 0 : i32
    %c0_i32_0 = arith.constant 0 : i32
    return %arg0, %c0_i32 : i32, i32
  }
  func.func @transform_1(%arg0: i32) -> (i32, i32, i32) {
    %c0_i32 = arith.constant 0 : i32
    %c0_i32_0 = arith.constant 0 : i32
    %c0_i32_1 = arith.constant 0 : i32
    %c0_i32_2 = arith.constant 0 : i32
    return %c0_i32, %c0_i32_0, %c0_i32_1 : i32, i32, i32
  }
  func.func @transform_2(%arg0: i32) -> (i32, i32, i32) {
    %c0_i32 = arith.constant 0 : i32
    %c0_i32_0 = arith.constant 0 : i32
    %c0_i32_1 = arith.constant 0 : i32
    %c0_i32_2 = arith.constant 0 : i32
    return %c0_i32, %c0_i32_0, %c0_i32_1 : i32, i32, i32
  }
  func.func @transform_3(%arg0: i32) -> (i32, i32) {
    %c0_i32 = arith.constant 0 : i32
    %c0_i32_0 = arith.constant 0 : i32
    return %arg0, %c0_i32 : i32, i32
  }
  func.func @transform_4(%arg0: i32) -> (i32, i32) {
    %c0_i32 = arith.constant 0 : i32
    %c0_i32_0 = arith.constant 0 : i32
    return %arg0, %c0_i32 : i32, i32
  }
}

</mosaic_0001>

<llo_original>
// kernel: vae_forward.1
$region0: #{vae_forward.1}
  #allocation0 [shape = 'u32[]', space=smem, size = 0x4, offset = 0x4, fixed_abs, tag = 'smem constant byte address 0x4 - core index']
  #allocation1 [shape = 'u32[144,128]{1,0:T(1,128)}', space=vmem, size = 0x12000, scoped, tag = 'internal scratch']
  %s0 = inlined_call_operand.hbm [shape: f32[8,64], index: 0, kind: input, shape index: {}]
  %s1 = inlined_call_operand.hbm [shape: f32[4,128,128], index: 1, kind: input, shape index: {}]
  %s2 = inlined_call_operand.hbm [shape: f32[4,1,128], index: 2, kind: input, shape index: {}]
  %s3 = inlined_call_operand.vmem [shape: f32[8,16], index: 3, kind: input, shape index: {}]
  %s4 = inlined_call_operand.vmem [shape: f32[8,96], index: 4, kind: output, shape index: {}]
  %s5 = sld [smem:[#allocation0]]
  $region38: #{vae_forward.1} parent=0
    _
  %s7 = ssub.s32 1, %s5
  %s8 = scalar_select 0, %s7, %s5
  $region1: #{vae_forward.1} parent=0
    #allocation2 [shape = 'u8[4096]{0}', space=vmem, size = 0x1000, scoped, tag = 'input window, operand 0, single buffered']
    #allocation3 [shape = 's32[1]{0}', space=sflag, size = 0x4, scoped, tag = 'scoped memory for vae_forward.1']
    #allocation4 [shape = 'u8[262144]{0}', space=vmem, size = 0x40000, scoped, tag = 'input window, operand 1, single buffered']
    #allocation5 [shape = 's32[1]{0}', space=sflag, size = 0x4, scoped, tag = 'scoped memory for vae_forward.1']
    #allocation6 [shape = 'u8[2048]{0}', space=vmem, size = 0x800, scoped, tag = 'input window, operand 2, single buffered']
    %9 = vsyncpa [#allocation3], 0
    %10 = vsyncpa [#allocation5], 0
    // Predicated region
    $region2: #{vae_forward.1} parent=1 // pred_check
      _
    $region3: #{vae_forward.1} parent=1 // pred_check_branch
      %12 = sbr.rel (0) target = $region5
    $region4: #{vae_forward.1} parent=1 // pred_region
      %s14 = ssub.s32 128, 128
      %15 = vsyncadd [#allocation3], %s14
      %s17 = sshll.u32 [#allocation2], 4
      %s18 = int_to_ptr.vmem [resolvable:$true] %s17
      %20 = dma.hbm_to_vmem [thread:$0]  %s0, 128, %s18, [#allocation3]
    $region5: #{vae_forward.1} parent=1 // pred_fallthru
      _
    // Predicated region
    $region6: #{vae_forward.1} parent=1 // pred_check
      _
    $region7: #{vae_forward.1} parent=1 // pred_check_branch
      %22 = sbr.rel (0) target = $region9
    $region8: #{vae_forward.1} parent=1 // pred_region
      %s24 = ssub.s32 8192, 8192
      %25 = vsyncadd [#allocation5], %s24
      %s26 = sshll.u32 [#allocation4], 4
      %s27 = int_to_ptr.vmem [resolvable:$true] %s26
      %32 = dma.hbm_to_vmem [thread:$0]  %s1, 8192, %s27, [#allocation5], 128, 128, 8
    $region9: #{vae_forward.1} parent=1 // pred_fallthru
      _
    // Predicated region
    $region10: #{vae_forward.1} parent=1 // pred_check
      _
    $region11: #{vae_forward.1} parent=1 // pred_check_branch
      %34 = sbr.rel (0) target = $region13
    $region12: #{vae_forward.1} parent=1 // pred_region
      %s36 = ssub.s32 64, 64
      %37 = vsyncadd [#allocation5], %s36
      %s38 = sshll.u32 [#allocation6], 4
      %s39 = int_to_ptr.vmem [resolvable:$true] %s38
      %44 = dma.hbm_to_vmem [thread:$0]  %s2, 64, %s39, [#allocation5], 16, 16, 1
    $region13: #{vae_forward.1} parent=1 // pred_fallthru
      _
    // Predicated region
    $region14: #{vae_forward.1} parent=1 // pred_check
      _
    $region15: #{vae_forward.1} parent=1 // pred_check_branch
      %46 = sbr.rel (0) target = $region17
    $region16: #{vae_forward.1} parent=1 // pred_region
      _
    $region17: #{vae_forward.1} parent=1 // pred_fallthru
      _
    // Predicated region
    $region18: #{vae_forward.1} parent=1 // pred_check
      _
    $region19: #{vae_forward.1} parent=1 // pred_check_branch
      %48 = sbr.rel (0) target = $region21
    $region20: #{vae_forward.1} parent=1 // pred_region
      %49 = dma.done [#allocation3], 128
    $region21: #{vae_forward.1} parent=1 // pred_fallthru
      _
    // Predicated region
    $region22: #{vae_forward.1} parent=1 // pred_check
      _
    $region23: #{vae_forward.1} parent=1 // pred_check_branch
      %51 = sbr.rel (0) target = $region25
    $region24: #{vae_forward.1} parent=1 // pred_region
      %52 = dma.done [#allocation5], 8192
    $region25: #{vae_forward.1} parent=1 // pred_fallthru
      _
    // Predicated region
    $region26: #{vae_forward.1} parent=1 // pred_check
      _
    $region27: #{vae_forward.1} parent=1 // pred_check_branch
      %54 = sbr.rel (0) target = $region29
    $region28: #{vae_forward.1} parent=1 // pred_region
      %55 = dma.done [#allocation5], 64
    $region29: #{vae_forward.1} parent=1 // pred_fallthru
      _
    %v56 = vld [vmem:[#allocation2] sm:$0xff]
    %v57 = vld [vmem:[#allocation4] sm:$0xff]
    %v58 = vld [vmem:[#allocation4 + $0x8] sm:$0xff]
    %v59 = vld [vmem:[#allocation4 + $0x10] sm:$0xff]
    %v60 = vld [vmem:[#allocation4 + $0x18] sm:$0xff]
    %v61 = vld [vmem:[#allocation4 + $0x20] sm:$0xff]
    %v62 = vld [vmem:[#allocation4 + $0x28] sm:$0xff]
    %v63 = vld [vmem:[#allocation4 + $0x30] sm:$0xff]
    %v64 = vld [vmem:[#allocation4 + $0x38] sm:$0xff]
    %v65 = vld [vmem:[#allocation6] sm:$0x1]
    %v67 = vlaneseq
    %v68 = vshrl.u32 %v67, 7
    %v69 = vsub.s32 0, %v68
    %v70 = vrot.slane %v65, %v69
    %vm72 = vcmask 523264
    %v74 = vsel %vm72, %v56, 0
    %76 = vmatprep.subr.mxu0 0.0
    %77 = vmatpush1.msra.mxu0 %v57
    %78 = vmatprep.subr.mxu0 0.0
    %79 = vmatpush1.msra.mxu0 %v58
    %80 = vmatprep.subr.mxu0 0.0
    %81 = vmatpush1.msra.mxu0 %v59
    %82 = vmatprep.subr.mxu0 0.0
    %83 = vmatpush1.msra.mxu0 %v60
    %84 = vmatprep.subr.mxu0 0.0
    %85 = vmatpush1.msra.mxu0 %v61
    %86 = vmatprep.subr.mxu0 0.0
    %87 = vmatpush1.msra.mxu0 %v62
    %88 = vmatprep.subr.mxu0 0.0
    %89 = vmatpush1.msra.mxu0 %v63
    %90 = vmatprep.subr.mxu0 0.0
    %91 = vmatpush1.msra.mxu0 %v64
    %92 = vmatprep.subr.mxu0 0.0
    %93 = vmatpush1.msra.mxu0 0.0
    %94 = vmatprep.subr.mxu0 0.0
    %95 = vmatpush1.msra.mxu0 0.0
    %96 = vmatprep.subr.mxu0 0.0
    %97 = vmatpush1.msra.mxu0 0.0
    %98 = vmatprep.subr.mxu0 0.0
    %99 = vmatpush1.msra.mxu0 0.0
    %100 = vmatprep.subr.mxu0 0.0
    %101 = vmatpush1.msra.mxu0 0.0
    %102 = vmatprep.subr.mxu0 0.0
    %103 = vmatpush1.msra.mxu0 0.0
    %104 = vmatprep.subr.mxu0 0.0
    %105 = vmatpush1.msra.mxu0 0.0
    %106 = vmatprep.subr.mxu0 0.0
    %107 = vmatpush1.msra.mxu0 0.0
    %108 = vmatprep.subr.mxu0 0.0
    %109 = vmatpush1.msra.mxu0 0.0
    %110 = vmatprep.subr.mxu0 0.0
    %111 = vmatpush1.msra.mxu0 0.0
    %112 = vmatprep.subr.mxu0 0.0
    %113 = vmatpush1.msra.mxu0 0.0
    %114 = vmatprep.subr.mxu0 0.0
    %115 = vmatpush1.msra.mxu0 0.0
    %116 = vmatprep.subr.mxu0 0.0
    %117 = vmatpush1.msra.mxu0 0.0
    %118 = vmatprep.subr.mxu0 0.0
    %119 = vmatpush1.msra.mxu0 0.0
    %120 = vmatprep.subr.mxu0 0.0
    %121 = vmatpush1.msra.mxu0 0.0
    %122 = vmatprep.subr.mxu0 0.0
    %123 = vmatpush1.msra.mxu0 0.0
    %124 = vmatprep.subr.mxu0 0.0
    %125 = vmatpush1.msra.mxu0 0.0
    %126 = vmatprep.subr.mxu0 0.0
    %127 = vmatpush1.msra.mxu0 0.0
    %128 = vmatprep.subr.mxu0 0.0
    %129 = vmatpush1.msra.mxu0 0.0
    %130 = vmatprep.subr.mxu0 0.0
    %131 = vmatpush1.msra.mxu0 0.0
    %132 = vmatprep.subr.mxu0 0.0
    %133 = vmatpush1.msra.mxu0 0.0
    %134 = vmatprep.subr.mxu0 0.0
    %135 = vmatpush1.msra.mxu0 0.0
    %136 = vmatprep.subr.mxu0 0.0
    %137 = vmatpush1.msra.mxu0 0.0
    %138 = vmatprep.subr.mxu0 0.0
    %139 = vmatpush1.msra.mxu0 0.0
    %140 = vmatprep.mubr.f32.mxu0 0.0
    %141 = vmatmul.mubr.f32.gmra.mrb[0].mxu0 %v74
    %v142 = vpop.f32.mrb[0].mxu0
    %v143 = vadd.f32 %v70, %v142
    %v144 = vpop.f32.mrb[0].mxu0
    %145 = vdwg.mxu0
    %v146 = vmax.f32 %v143, 0.0
    %s147 = scalar_lea.vmem [#allocation4], 128
    %v148 = vld [vmem:[%s147] sm:$0xff]
    %v149 = vld [vmem:[%s147 + $0x8] sm:$0xff]
    %v150 = vld [vmem:[%s147 + $0x10] sm:$0xff]
    %v151 = vld [vmem:[%s147 + $0x18] sm:$0xff]
    %v152 = vld [vmem:[%s147 + $0x20] sm:$0xff]
    %v153 = vld [vmem:[%s147 + $0x28] sm:$0xff]
    %v154 = vld [vmem:[%s147 + $0x30] sm:$0xff]
    %v155 = vld [vmem:[%s147 + $0x38] sm:$0xff]
    %v156 = vld [vmem:[%s147 + $0x40] sm:$0xff]
    %v157 = vld [vmem:[%s147 + $0x48] sm:$0xff]
    %v158 = vld [vmem:[%s147 + $0x50] sm:$0xff]
    %v159 = vld [vmem:[%s147 + $0x58] sm:$0xff]
    %v160 = vld [vmem:[%s147 + $0x60] sm:$0xff]
    %v161 = vld [vmem:[%s147 + $0x68] sm:$0xff]
    %v162 = vld [vmem:[%s147 + $0x70] sm:$0xff]
    %v163 = vld [vmem:[%s147 + $0x78] sm:$0xff]
    %s164 = scalar_lea.vmem [#allocation6], 1
    %v165 = vld [vmem:[%s164] sm:$0x1]
    %v167 = vlaneseq
    %v168 = vshrl.u32 %v167, 7
    %v169 = vsub.s32 0, %v168
    %v170 = vrot.slane %v165, %v169
    %172 = vmatprep.subr.mxu0 0.0
    %173 = vmatpush1.msra.mxu0 %v148
    %174 = vmatprep.subr.mxu0 0.0
    %175 = vmatpush1.msra.mxu0 %v149
    %176 = vmatprep.subr.mxu0 0.0
    %177 = vmatpush1.msra.mxu0 %v150
    %178 = vmatprep.subr.mxu0 0.0
    %179 = vmatpush1.msra.mxu0 %v151
    %180 = vmatprep.subr.mxu0 0.0
    %181 = vmatpush1.msra.mxu0 %v152
    %182 = vmatprep.subr.mxu0 0.0
    %183 = vmatpush1.msra.mxu0 %v153
    %184 = vmatprep.subr.mxu0 0.0
    %185 = vmatpush1.msra.mxu0 %v154
    %186 = vmatprep.subr.mxu0 0.0
    %187 = vmatpush1.msra.mxu0 %v155
    %188 = vmatprep.subr.mxu0 0.0
    %189 = vmatpush1.msra.mxu0 %v156
    %190 = vmatprep.subr.mxu0 0.0
    %191 = vmatpush1.msra.mxu0 %v157
    %192 = vmatprep.subr.mxu0 0.0
    %193 = vmatpush1.msra.mxu0 %v158
    %194 = vmatprep.subr.mxu0 0.0
    %195 = vmatpush1.msra.mxu0 %v159
    %196 = vmatprep.subr.mxu0 0.0
    %197 = vmatpush1.msra.mxu0 %v160
    %198 = vmatprep.subr.mxu0 0.0
    %199 = vmatpush1.msra.mxu0 %v161
    %200 = vmatprep.subr.mxu0 0.0
    %201 = vmatpush1.msra.mxu0 %v162
    %202 = vmatprep.subr.mxu0 0.0
    %203 = vmatpush1.msra.mxu0 %v163
    %204 = vmatprep.subr.mxu0 0.0
    %205 = vmatpush1.msra.mxu0 0.0
    %206 = vmatprep.subr.mxu0 0.0
    %207 = vmatpush1.msra.mxu0 0.0
    %208 = vmatprep.subr.mxu0 0.0
    %209 = vmatpush1.msra.mxu0 0.0
    %210 = vmatprep.subr.mxu0 0.0
    %211 = vmatpush1.msra.mxu0 0.0
    %212 = vmatprep.subr.mxu0 0.0
    %213 = vmatpush1.msra.mxu0 0.0
    %214 = vmatprep.subr.mxu0 0.0
    %215 = vmatpush1.msra.mxu0 0.0
    %216 = vmatprep.subr.mxu0 0.0
    %217 = vmatpush1.msra.mxu0 0.0
    %218 = vmatprep.subr.mxu0 0.0
    %219 = vmatpush1.msra.mxu0 0.0
    %220 = vmatprep.subr.mxu0 0.0
    %221 = vmatpush1.msra.mxu0 0.0
    %222 = vmatprep.subr.mxu0 0.0
    %223 = vmatpush1.msra.mxu0 0.0
    %224 = vmatprep.subr.mxu0 0.0
    %225 = vmatpush1.msra.mxu0 0.0
    %226 = vmatprep.subr.mxu0 0.0
    %227 = vmatpush1.msra.mxu0 0.0
    %228 = vmatprep.subr.mxu0 0.0
    %229 = vmatpush1.msra.mxu0 0.0
    %230 = vmatprep.subr.mxu0 0.0
    %231 = vmatpush1.msra.mxu0 0.0
    %232 = vmatprep.subr.mxu0 0.0
    %233 = vmatpush1.msra.mxu0 0.0
    %234 = vmatprep.subr.mxu0 0.0
    %235 = vmatpush1.msra.mxu0 0.0
    %236 = vmatprep.mubr.f32.mxu0 0.0
    %237 = vmatmul.mubr.f32.gmra.mrb[0].mxu0 %v146
    %v238 = vpop.f32.mrb[0].mxu0
    %v239 = vadd.f32 %v170, %v238
    %v240 = vpop.f32.mrb[0].mxu0
    %241 = vdwg.mxu0
    %v242 = vmul.f32 %v239, 0.5
    %v243 = vmul.f32 %v242, 1.442695
    %v244 = vpow.pop %v243
    %v245 = vld [vmem:[%s3] sm:$0xff]
    %247 = vrot.lane.b32.xlu0 %v245, 16
    %v248 = vpop.permute.xlu0 %247
    %v250 = vmul.f32 %v244, %v248
    %252 = vrot.lane.b32.xlu0 %v250, 112
    %v253 = vpop.permute.xlu0 %252
    %v255 = vadd.f32 %v239, %v253
    %s256 = scalar_lea.vmem [#allocation4], 256
    %v257 = vld [vmem:[%s256] sm:$0xff]
    %v258 = vld [vmem:[%s256 + $0x8] sm:$0xff]
    %s259 = scalar_lea.vmem [#allocation6], 2
    %v260 = vld [vmem:[%s259] sm:$0x1]
    %v262 = vlaneseq
    %v263 = vshrl.u32 %v262, 7
    %v264 = vsub.s32 0, %v263
    %v265 = vrot.slane %v260, %v264
    %vm267 = vcmask 130048
    %v269 = vsel %vm267, %v255, 0
    %271 = vmatprep.subr.mxu0 0.0
    %272 = vmatpush1.msra.mxu0 %v257
    %273 = vmatprep.subr.mxu0 0.0
    %274 = vmatpush1.msra.mxu0 %v258
    %275 = vmatprep.subr.mxu0 0.0
    %276 = vmatpush1.msra.mxu0 0.0
    %277 = vmatprep.subr.mxu0 0.0
    %278 = vmatpush1.msra.mxu0 0.0
    %279 = vmatprep.subr.mxu0 0.0
    %280 = vmatpush1.msra.mxu0 0.0
    %281 = vmatprep.subr.mxu0 0.0
    %282 = vmatpush1.msra.mxu0 0.0
    %283 = vmatprep.subr.mxu0 0.0
    %284 = vmatpush1.msra.mxu0 0.0
    %285 = vmatprep.subr.mxu0 0.0
    %286 = vmatpush1.msra.mxu0 0.0
    %287 = vmatprep.subr.mxu0 0.0
    %288 = vmatpush1.msra.mxu0 0.0
    %289 = vmatprep.subr.mxu0 0.0
    %290 = vmatpush1.msra.mxu0 0.0
    %291 = vmatprep.subr.mxu0 0.0
    %292 = vmatpush1.msra.mxu0 0.0
    %293 = vmatprep.subr.mxu0 0.0
    %294 = vmatpush1.msra.mxu0 0.0
    %295 = vmatprep.subr.mxu0 0.0
    %296 = vmatpush1.msra.mxu0 0.0
    %297 = vmatprep.subr.mxu0 0.0
    %298 = vmatpush1.msra.mxu0 0.0
    %299 = vmatprep.subr.mxu0 0.0
    %300 = vmatpush1.msra.mxu0 0.0
    %301 = vmatprep.subr.mxu0 0.0
    %302 = vmatpush1.msra.mxu0 0.0
    %303 = vmatprep.subr.mxu0 0.0
    %304 = vmatpush1.msra.mxu0 0.0
    %305 = vmatprep.subr.mxu0 0.0
    %306 = vmatpush1.msra.mxu0 0.0
    %307 = vmatprep.subr.mxu0 0.0
    %308 = vmatpush1.msra.mxu0 0.0
    %309 = vmatprep.subr.mxu0 0.0
    %310 = vmatpush1.msra.mxu0 0.0
    %311 = vmatprep.subr.mxu0 0.0
    %312 = vmatpush1.msra.mxu0 0.0
    %313 = vmatprep.subr.mxu0 0.0
    %314 = vmatpush1.msra.mxu0 0.0
    %315 = vmatprep.subr.mxu0 0.0
    %316 = vmatpush1.msra.mxu0 0.0
    %317 = vmatprep.subr.mxu0 0.0
    %318 = vmatpush1.msra.mxu0 0.0
    %319 = vmatprep.subr.mxu0 0.0
    %320 = vmatpush1.msra.mxu0 0.0
    %321 = vmatprep.subr.mxu0 0.0
    %322 = vmatpush1.msra.mxu0 0.0
    %323 = vmatprep.subr.mxu0 0.0
    %324 = vmatpush1.msra.mxu0 0.0
    %325 = vmatprep.subr.mxu0 0.0
    %326 = vmatpush1.msra.mxu0 0.0
    %327 = vmatprep.subr.mxu0 0.0
    %328 = vmatpush1.msra.mxu0 0.0
    %329 = vmatprep.subr.mxu0 0.0
    %330 = vmatpush1.msra.mxu0 0.0
    %331 = vmatprep.subr.mxu0 0.0
    %332 = vmatpush1.msra.mxu0 0.0
    %333 = vmatprep.subr.mxu0 0.0
    %334 = vmatpush1.msra.mxu0 0.0
    %335 = vmatprep.mubr.f32.mxu0 0.0
    %336 = vmatmul.mubr.f32.gmra.mrb[0].mxu0 %v269
    %v337 = vpop.f32.mrb[0].mxu0
    %v338 = vadd.f32 %v265, %v337
    %v339 = vpop.f32.mrb[0].mxu0
    %340 = vdwg.mxu0
    %v341 = vmax.f32 %v338, 0.0
    %s342 = scalar_lea.vmem [#allocation4], 384
    %v343 = vld [vmem:[%s342] sm:$0xff]
    %v344 = vld [vmem:[%s342 + $0x8] sm:$0xff]
    %v345 = vld [vmem:[%s342 + $0x10] sm:$0xff]
    %v346 = vld [vmem:[%s342 + $0x18] sm:$0xff]
    %v347 = vld [vmem:[%s342 + $0x20] sm:$0xff]
    %v348 = vld [vmem:[%s342 + $0x28] sm:$0xff]
    %v349 = vld [vmem:[%s342 + $0x30] sm:$0xff]
    %v350 = vld [vmem:[%s342 + $0x38] sm:$0xff]
    %v351 = vld [vmem:[%s342 + $0x40] sm:$0xff]
    %v352 = vld [vmem:[%s342 + $0x48] sm:$0xff]
    %v353 = vld [vmem:[%s342 + $0x50] sm:$0xff]
    %v354 = vld [vmem:[%s342 + $0x58] sm:$0xff]
    %v355 = vld [vmem:[%s342 + $0x60] sm:$0xff]
    %v356 = vld [vmem:[%s342 + $0x68] sm:$0xff]
    %v357 = vld [vmem:[%s342 + $0x70] sm:$0xff]
    %v358 = vld [vmem:[%s342 + $0x78] sm:$0xff]
    %s359 = scalar_lea.vmem [#allocation6], 3
    %v360 = vld [vmem:[%s359] sm:$0x1]
    %v362 = vlaneseq
    %v363 = vshrl.u32 %v362, 7
    %v364 = vsub.s32 0, %v363
    %v365 = vrot.slane %v360, %v364
    %367 = vmatprep.subr.mxu0 0.0
    %368 = vmatpush1.msra.mxu0 %v343
    %369 = vmatprep.subr.mxu0 0.0
    %370 = vmatpush1.msra.mxu0 %v344
    %371 = vmatprep.subr.mxu0 0.0
    %372 = vmatpush1.msra.mxu0 %v345
    %373 = vmatprep.subr.mxu0 0.0
    %374 = vmatpush1.msra.mxu0 %v346
    %375 = vmatprep.subr.mxu0 0.0
    %376 = vmatpush1.msra.mxu0 %v347
    %377 = vmatprep.subr.mxu0 0.0
    %378 = vmatpush1.msra.mxu0 %v348
    %379 = vmatprep.subr.mxu0 0.0
    %380 = vmatpush1.msra.mxu0 %v349
    %381 = vmatprep.subr.mxu0 0.0
    %382 = vmatpush1.msra.mxu0 %v350
    %383 = vmatprep.subr.mxu0 0.0
    %384 = vmatpush1.msra.mxu0 %v351
    %385 = vmatprep.subr.mxu0 0.0
    %386 = vmatpush1.msra.mxu0 %v352
    %387 = vmatprep.subr.mxu0 0.0
    %388 = vmatpush1.msra.mxu0 %v353
    %389 = vmatprep.subr.mxu0 0.0
    %390 = vmatpush1.msra.mxu0 %v354
    %391 = vmatprep.subr.mxu0 0.0
    %392 = vmatpush1.msra.mxu0 %v355
    %393 = vmatprep.subr.mxu0 0.0
    %394 = vmatpush1.msra.mxu0 %v356
    %395 = vmatprep.subr.mxu0 0.0
    %396 = vmatpush1.msra.mxu0 %v357
    %397 = vmatprep.subr.mxu0 0.0
    %398 = vmatpush1.msra.mxu0 %v358
    %399 = vmatprep.subr.mxu0 0.0
    %400 = vmatpush1.msra.mxu0 0.0
    %401 = vmatprep.subr.mxu0 0.0
    %402 = vmatpush1.msra.mxu0 0.0
    %403 = vmatprep.subr.mxu0 0.0
    %404 = vmatpush1.msra.mxu0 0.0
    %405 = vmatprep.subr.mxu0 0.0
    %406 = vmatpush1.msra.mxu0 0.0
    %407 = vmatprep.subr.mxu0 0.0
    %408 = vmatpush1.msra.mxu0 0.0
    %409 = vmatprep.subr.mxu0 0.0
    %410 = vmatpush1.msra.mxu0 0.0
    %411 = vmatprep.subr.mxu0 0.0
    %412 = vmatpush1.msra.mxu0 0.0
    %413 = vmatprep.subr.mxu0 0.0
    %414 = vmatpush1.msra.mxu0 0.0
    %415 = vmatprep.subr.mxu0 0.0
    %416 = vmatpush1.msra.mxu0 0.0
    %417 = vmatprep.subr.mxu0 0.0
    %418 = vmatpush1.msra.mxu0 0.0
    %419 = vmatprep.subr.mxu0 0.0
    %420 = vmatpush1.msra.mxu0 0.0
    %421 = vmatprep.subr.mxu0 0.0
    %422 = vmatpush1.msra.mxu0 0.0
    %423 = vmatprep.subr.mxu0 0.0
    %424 = vmatpush1.msra.mxu0 0.0
    %425 = vmatprep.subr.mxu0 0.0
    %426 = vmatpush1.msra.mxu0 0.0
    %427 = vmatprep.subr.mxu0 0.0
    %428 = vmatpush1.msra.mxu0 0.0
    %429 = vmatprep.subr.mxu0 0.0
    %430 = vmatpush1.msra.mxu0 0.0
    %431 = vmatprep.mubr.f32.mxu0 0.0
    %432 = vmatmul.mubr.f32.gmra.mrb[0].mxu0 %v341
    %v433 = vpop.f32.mrb[0].mxu0
    %v434 = vadd.f32 %v365, %v433
    %v435 = vpop.f32.mrb[0].mxu0
    %436 = vdwg.mxu0
    %v437 = vmul.f32 %v434, 0.5
    %v438 = vtanh.pop %v437
    %v439 = vadd.f32 %v438, 1.0
    %v440 = vmul.f32 %v439, 0.5
    %442 = vrot.lane.b32.xlu0 %v440, 32
    %v443 = vpop.permute.xlu0 %442
    %vm445 = vcmask 261120
    %v446 = vsel %vm445, %v239, %v443
    %vm447 = vcmask 785408
    %448 = vst.msk [vmem:[%s4] sm:$0xff] %vm447, %v446
    // Predicated region
    $region30: #{vae_forward.1} parent=1 // pred_check
      _
    $region31: #{vae_forward.1} parent=1 // pred_check_branch
      %450 = sbr.rel (0) target = $region33
    $region32: #{vae_forward.1} parent=1 // pred_region
      _
    $region33: #{vae_forward.1} parent=1 // pred_fallthru
      _
    // Predicated region
    $region34: #{vae_forward.1} parent=1 // pred_check
      _
    $region35: #{vae_forward.1} parent=1 // pred_check_branch
      %452 = sbr.rel (0) target = $region37
    $region36: #{vae_forward.1} parent=1 // pred_region
      _
    $region37: #{vae_forward.1} parent=1 // pred_fallthru
      _
    %453 = vsyncpa [#allocation3], 1
    %454 = vsyncpa [#allocation5], 1

</llo_original>
